<compile_context>
chip_gen: v6e
topology: v6e:2x2x1
jax: 0.10.0
libtpu: 0.0.40
codegen_flags: <defaults>
</compile_context>

<pallas_src>
import jax
import jax.numpy as jnp
from jax import lax
from jax.experimental import pallas as pl
from jax.experimental.pallas import tpu as pltpu

EPS = 1e-5  # nn.LayerNorm default


def _layernorm_f32(h, gamma, beta):
    mu = jnp.mean(h, axis=-1, keepdims=True)
    d = h - mu
    var = jnp.mean(d * d, axis=-1, keepdims=True)
    return d * lax.rsqrt(var + EPS) * gamma + beta   # rsqrt -> EUP slot


def residual_block_kernel(x_ref, w1_ref, w2_ref, p_ref, o_ref):
    # Packed params (8, H) f32: rows = b1, g1, be1, b2, g2, be2, pad, pad.
    p = p_ref[...].astype(jnp.float32)
    b1, g1, be1 = p[0:1, :], p[1:2, :], p[2:3, :]
    b2, g2, be2 = p[3:4, :], p[4:5, :], p[5:6, :]

    # fc1: MXU in weight dtype (bf16 by default), f32 accumulation.
    h = jnp.dot(x_ref[...].astype(w1_ref.dtype), w1_ref[...],
                preferred_element_type=jnp.float32) + b1
    h = _layernorm_f32(h, g1, be1)     # norm1 (f32 VPU + EUP)
    h = jnp.maximum(h, 0.0)            # relu
    # dropout: eval-mode identity.
    # TODO(synk): training-mode dropout (prng mask + 1/(1-p) scaling) not emitted.

    # fc2
    h = jnp.dot(h.astype(w2_ref.dtype), w2_ref[...],
                preferred_element_type=jnp.float32) + b2
    h = _layernorm_f32(h, g2, be2)     # norm2
    # Residual cast deferred to the add point: only the original x block stays live.
    o_ref[...] = jnp.maximum(h + x_ref[...].astype(jnp.float32), 0.0).astype(o_ref.dtype)


def _vmem_capacity_bytes():
    try:
        return int(pltpu.get_tpu_info().vmem_capacity_bytes)
    except Exception:
        return 128 << 20  # conservative default (v5e/v6e)


def _pick_tile_b(B, H, vmem_cap):
    """Generation-aware batch-tile choice.

    - v7x-class (<= 64 MiB VMEM): prefer 256/128-row tiles (smaller streaming +
      intermediate footprint), fall back to 512 only if nothing else divides B.
    - 128 MiB chips (v5e/v6e): allow up to 1024-row tiles when H <= 1024 to
      amortize per-grid-step overhead.
    Prefers an EVEN number of grid steps (>= 2) so the parallel batch axis
    shards evenly across v7x's two TensorCores; falls back to >= 2 steps, then
    to the whole batch.  Candidates are biased toward multiples of 128.
    """
    if vmem_cap <= (64 << 20):
        candidates = (256, 128, 512, 64, 32, 16, 8)
    elif H <= 1024:
        candidates = (1024, 512, 256, 128, 64, 32, 16, 8)
    else:
        candidates = (512, 256, 128, 64, 32, 16, 8)
    for t in candidates:                       # pass 1: even step count
        if B % t == 0 and (B // t) >= 2 and (B // t) % 2 == 0:
            return t
    for t in candidates:                       # pass 2: any >= 2 steps
        if B % t == 0 and (B // t) >= 2:
            return t
    return B                                   # tiny / awkward B: single step


def prepare_residual_block_params(params, matmul_dtype=jnp.bfloat16):
    """One-time prep (do this once per set of weights, outside the hot loop):
    transpose + cast Linear weights to [H_in, H_out] in the MXU dtype and pack
    the six (H,) bias/gamma/beta vectors into one sublane-aligned (8, H) f32
    array (single untiled BlockSpec instead of six sublane-1 specs)."""
    H = params["w1"].shape[0]
    zeros = jnp.zeros((H,), jnp.float32)
    packed = jnp.stack([params["b1"], params["g1"], params["be1"],
                        params["b2"], params["g2"], params["be2"],
                        zeros, zeros]).astype(jnp.float32)
    return {
        "w1t": params["w1"].T.astype(matmul_dtype),   # fc1.weight -> [H_in, H_out]
        "w2t": params["w2"].T.astype(matmul_dtype),   # fc2.weight -> [H_in, H_out]
        "packed": packed,
    }


def residual_block(x, prepared, *, tile_b=None):
    """x: [B, H].  prepared: output of prepare_residual_block_params()."""
    B, H = x.shape
    w1t, w2t, packed = prepared["w1t"], prepared["w2t"], prepared["packed"]
    w_itemsize = jnp.dtype(w1t.dtype).itemsize
    x_itemsize = jnp.dtype(x.dtype).itemsize

    vmem_cap = _vmem_capacity_bytes()
    if tile_b is None:
        tile_b = _pick_tile_b(B, H, vmem_cap)
    assert B % tile_b == 0, (B, tile_b)

    # VMEM budget:
    #   weights + packed params: single-buffered (Buffered(1), fetched once)
    #   x / out tiles:           double-buffered
    #   f32 intermediates:       headroom
    vmem_need = (2 * H * H * w_itemsize
                 + 8 * H * 4
                 + 2 * tile_b * H * x_itemsize * 2
                 + 4 * tile_b * H * 4)
    vmem_limit = int(min(max(vmem_need * 5 // 4 + (2 << 20), 16 << 20),
                         (vmem_cap * 85) // 100))
    # TODO(synk): if 2*H*H*w_itemsize alone approaches vmem_limit (large H on
    # v7x's 64 MiB), switch to a K/N-tiled weight path with accumulator scratch.

    whole = lambda i: (0, 0)  # weights / packed params: one block, never re-fetched

    cost = pl.CostEstimate(
        flops=int(4 * B * H * H),                        # two [B,H] x [H,H] matmuls
        transcendentals=0,
        bytes_accessed=int(2 * B * H * x_itemsize        # x in + out
                           + 2 * H * H * w_itemsize      # w1 + w2
                           + 8 * H * 4))                 # packed params

    return pl.pallas_call(
        residual_block_kernel,
        out_shape=jax.ShapeDtypeStruct((B, H), x.dtype),
        grid_spec=pltpu.PrefetchScalarGridSpec(
            num_scalar_prefetch=0,
            grid=(B // tile_b,),
            in_specs=[
                pl.BlockSpec((tile_b, H), lambda i: (i, 0)),                  # x tile
                pl.BlockSpec((H, H), whole, pipeline_mode=pl.Buffered(1)),    # w1.T
                pl.BlockSpec((H, H), whole, pipeline_mode=pl.Buffered(1)),    # w2.T
                pl.BlockSpec((8, H), whole, pipeline_mode=pl.Buffered(1)),    # packed
            ],
            out_specs=pl.BlockSpec((tile_b, H), lambda i: (i, 0)),
        ),
        compiler_params=pltpu.CompilerParams(
            dimension_semantics=("parallel",),
            vmem_limit_bytes=vmem_limit),
        cost_estimate=cost,
    )(x, w1t, w2t, packed)


def _reference(x, params, matmul_dtype=jnp.float32):
    """Pure-JAX reference matching the PyTorch module (eval mode)."""
    def ln(h, g, b):
        mu = jnp.mean(h, axis=-1, keepdims=True)
        var = jnp.mean((h - mu) ** 2, axis=-1, keepdims=True)
        return (h - mu) / jnp.sqrt(var + EPS) * g + b

    md = matmul_dtype
    h = jnp.dot(x.astype(md), params["w1"].astype(md).T,
                preferred_element_type=jnp.float32) + params["b1"]
    h = ln(h, params["g1"], params["be1"])
    h = jnp.maximum(h, 0.0)
    h = jnp.dot(h.astype(md), params["w2"].astype(md).T,
                preferred_element_type=jnp.float32) + params["b2"]
    h = ln(h, params["g2"], params["be2"])
    return jnp.maximum(h + x, 0.0)


def _make_params(key, H):
    k_w1, k_b1, k_w2, k_b2 = jax.random.split(key, 4)
    return {
        "w1": jax.random.normal(k_w1, (H, H), jnp.float32) * 0.1,  # fc1.weight [out,in]
        "b1": jax.random.normal(k_b1, (H,), jnp.float32) * 0.1,    # fc1.bias
        "g1": jnp.ones((H,), jnp.float32),                         # norm1.weight
        "be1": jnp.zeros((H,), jnp.float32),                       # norm1.bias
        "w2": jax.random.normal(k_w2, (H, H), jnp.float32) * 0.1,  # fc2.weight
        "b2": jax.random.normal(k_b2, (H,), jnp.float32) * 0.1,    # fc2.bias
        "g2": jnp.ones((H,), jnp.float32),                         # norm2.weight
        "be2": jnp.zeros((H,), jnp.float32),                       # norm2.bias
    }


if __name__ == "__main__":
    key = jax.random.PRNGKey(0)
    k_a, k_b, k_c, k_d = jax.random.split(key, 4)

    # 1) Small-shape correctness check: f32 MXU path, tight tolerance.
    B, H = 8, 32
    x = jax.random.normal(k_a, (B, H), jnp.float32)
    params = _make_params(k_b, H)
    prep_f32 = prepare_residual_block_params(params, matmul_dtype=jnp.float32)
    out = jax.block_until_ready(residual_block(x, prep_f32))
    ref = _reference(x, params, matmul_dtype=jnp.float32)
    assert out.shape == (B, H)
    assert jnp.allclose(out, ref, atol=1e-5, rtol=1e-5), "f32 mismatch vs reference"

    # 2) Pipelined path at a TPU-friendly shape: lane-dense H, even grid-step
    #    count, default bf16 MXU operands with f32 LayerNorm/residual, and the
    #    one-time prepared weights reused across calls.
    B2, H2 = 256, 128
    x2 = jax.random.normal(k_c, (B2, H2), jnp.float32)
    params2 = _make_params(k_d, H2)
    prep_bf16 = prepare_residual_block_params(params2)          # default bf16
    out2 = jax.block_until_ready(residual_block(x2, prep_bf16))
    out2b = jax.block_until_ready(residual_block(x2, prep_bf16))  # reuse prepared weights
    ref2 = _reference(x2, params2, matmul_dtype=jnp.bfloat16)
    assert out2.shape == (B2, H2)
    assert jnp.allclose(out2, ref2, atol=3e-2, rtol=3e-2), "bf16 mismatch vs reference"
    assert jnp.array_equal(out2, out2b)

    print("KERNEL_OK")
</pallas_src>

<mosaic_0001>
module attributes {stable_mosaic.version = 11 : i64} {
  func.func @residual_block_kernel(%arg0: i32, %arg1: memref<8x32xf32, #tpu.memory_space<vmem>>, %arg2: memref<32x32xf32, #tpu.memory_space<vmem>>, %arg3: memref<32x32xf32, #tpu.memory_space<vmem>>, %arg4: memref<8x32xf32, #tpu.memory_space<vmem>>, %arg5: memref<8x32xf32, #tpu.memory_space<vmem>>) attributes {dimension_semantics = [#tpu.dimension_semantics<parallel>], iteration_bounds = array<i64: 1>, scalar_prefetch = 0 : i64, scratch_operands = 0 : i64, tpu.core_type = #tpu.core_type<tc>, window_params = [{transform_indices = @transform_0, window_bounds = array<i64: 8, 32>}, {pipeline_mode = #tpu.pipeline_mode<synchronous>, transform_indices = @transform_1, window_bounds = array<i64: 32, 32>}, {pipeline_mode = #tpu.pipeline_mode<synchronous>, transform_indices = @transform_2, window_bounds = array<i64: 32, 32>}, {pipeline_mode = #tpu.pipeline_mode<synchronous>, transform_indices = @transform_3, window_bounds = array<i64: 8, 32>}, {transform_indices = @transform_4, window_bounds = array<i64: 8, 32>}]} {
    %c0 = arith.constant 0 : index
    %c0_0 = arith.constant 0 : index
    %0 = vector.load %arg4[%c0, %c0_0] : memref<8x32xf32, #tpu.memory_space<vmem>>, vector<8x32xf32>
    %1 = vector.extract_strided_slice %0 {offsets = [0, 0], sizes = [1, 32], strides = [1, 1]} : vector<8x32xf32> to vector<1x32xf32>
    %2 = vector.extract_strided_slice %0 {offsets = [1, 0], sizes = [1, 32], strides = [1, 1]} : vector<8x32xf32> to vector<1x32xf32>
    %3 = vector.extract_strided_slice %0 {offsets = [2, 0], sizes = [1, 32], strides = [1, 1]} : vector<8x32xf32> to vector<1x32xf32>
    %4 = vector.extract_strided_slice %0 {offsets = [3, 0], sizes = [1, 32], strides = [1, 1]} : vector<8x32xf32> to vector<1x32xf32>
    %5 = vector.extract_strided_slice %0 {offsets = [4, 0], sizes = [1, 32], strides = [1, 1]} : vector<8x32xf32> to vector<1x32xf32>
    %6 = vector.extract_strided_slice %0 {offsets = [5, 0], sizes = [1, 32], strides = [1, 1]} : vector<8x32xf32> to vector<1x32xf32>
    %c0_1 = arith.constant 0 : index
    %c0_2 = arith.constant 0 : index
    %7 = vector.load %arg1[%c0_1, %c0_2] : memref<8x32xf32, #tpu.memory_space<vmem>>, vector<8x32xf32>
    %c0_3 = arith.constant 0 : index
    %c0_4 = arith.constant 0 : index
    %8 = vector.load %arg2[%c0_3, %c0_4] : memref<32x32xf32, #tpu.memory_space<vmem>>, vector<32x32xf32>
    %cst = arith.constant dense<0.000000e+00> : vector<8x32xf32>
    %9 = tpu.matmul %7, %8, %cst {dimension_numbers = #tpu.dot_dimension_numbers<[1], [0], [0], [1], [0, 0, 1, 1], [], []>} : vector<8x32xf32>, vector<32x32xf32>, vector<8x32xf32> -> vector<8x32xf32>
    %10 = vector.broadcast %1 : vector<1x32xf32> to vector<8x32xf32>
    %11 = arith.addf %9, %10 : vector<8x32xf32>
    %cst_5 = arith.constant dense<0.000000e+00> : vector<8xf32>
    %12 = vector.multi_reduction <add>, %11, %cst_5 [1] : vector<8x32xf32> to vector<8xf32>
    %13 = vector.shape_cast %12 : vector<8xf32> to vector<8x1xf32>
    %cst_6 = arith.constant 3.200000e+01 : f32
    %14 = vector.broadcast %cst_6 : f32 to vector<8x1xf32>
    %15 = arith.divf %13, %14 : vector<8x1xf32>
    %16 = vector.broadcast %15 : vector<8x1xf32> to vector<8x32xf32>
    %17 = arith.subf %11, %16 : vector<8x32xf32>
    %18 = arith.mulf %17, %17 : vector<8x32xf32>
    %cst_7 = arith.constant dense<0.000000e+00> : vector<8xf32>
    %19 = vector.multi_reduction <add>, %18, %cst_7 [1] : vector<8x32xf32> to vector<8xf32>
    %20 = vector.shape_cast %19 : vector<8xf32> to vector<8x1xf32>
    %cst_8 = arith.constant 3.200000e+01 : f32
    %21 = vector.broadcast %cst_8 : f32 to vector<8x1xf32>
    %22 = arith.divf %20, %21 : vector<8x1xf32>
    %cst_9 = arith.constant 9.99999974E-6 : f32
    %23 = vector.broadcast %cst_9 : f32 to vector<8x1xf32>
    %24 = arith.addf %22, %23 : vector<8x1xf32>
    %25 = math.rsqrt %24 : vector<8x1xf32>
    %26 = vector.broadcast %25 : vector<8x1xf32> to vector<8x32xf32>
    %27 = arith.mulf %17, %26 : vector<8x32xf32>
    %28 = vector.broadcast %2 : vector<1x32xf32> to vector<8x32xf32>
    %29 = arith.mulf %27, %28 : vector<8x32xf32>
    %30 = vector.broadcast %3 : vector<1x32xf32> to vector<8x32xf32>
    %31 = arith.addf %29, %30 : vector<8x32xf32>
    %cst_10 = arith.constant 0.000000e+00 : f32
    %32 = vector.broadcast %cst_10 : f32 to vector<8x32xf32>
    %33 = arith.maximumf %31, %32 : vector<8x32xf32>
    %c0_11 = arith.constant 0 : index
    %c0_12 = arith.constant 0 : index
    %34 = vector.load %arg3[%c0_11, %c0_12] : memref<32x32xf32, #tpu.memory_space<vmem>>, vector<32x32xf32>
    %cst_13 = arith.constant dense<0.000000e+00> : vector<8x32xf32>
    %35 = tpu.matmul %33, %34, %cst_13 {dimension_numbers = #tpu.dot_dimension_numbers<[1], [0], [0], [1], [0, 0, 1, 1], [], []>} : vector<8x32xf32>, vector<32x32xf32>, vector<8x32xf32> -> vector<8x32xf32>
    %36 = vector.broadcast %4 : vector<1x32xf32> to vector<8x32xf32>
    %37 = arith.addf %35, %36 : vector<8x32xf32>
    %cst_14 = arith.constant dense<0.000000e+00> : vector<8xf32>
    %38 = vector.multi_reduction <add>, %37, %cst_14 [1] : vector<8x32xf32> to vector<8xf32>
    %39 = vector.shape_cast %38 : vector<8xf32> to vector<8x1xf32>
    %cst_15 = arith.constant 3.200000e+01 : f32
    %40 = vector.broadcast %cst_15 : f32 to vector<8x1xf32>
    %41 = arith.divf %39, %40 : vector<8x1xf32>
    %42 = vector.broadcast %41 : vector<8x1xf32> to vector<8x32xf32>
    %43 = arith.subf %37, %42 : vector<8x32xf32>
    %44 = arith.mulf %43, %43 : vector<8x32xf32>
    %cst_16 = arith.constant dense<0.000000e+00> : vector<8xf32>
    %45 = vector.multi_reduction <add>, %44, %cst_16 [1] : vector<8x32xf32> to vector<8xf32>
    %46 = vector.shape_cast %45 : vector<8xf32> to vector<8x1xf32>
    %cst_17 = arith.constant 3.200000e+01 : f32
    %47 = vector.broadcast %cst_17 : f32 to vector<8x1xf32>
    %48 = arith.divf %46, %47 : vector<8x1xf32>
    %cst_18 = arith.constant 9.99999974E-6 : f32
    %49 = vector.broadcast %cst_18 : f32 to vector<8x1xf32>
    %50 = arith.addf %48, %49 : vector<8x1xf32>
    %51 = math.rsqrt %50 : vector<8x1xf32>
    %52 = vector.broadcast %51 : vector<8x1xf32> to vector<8x32xf32>
    %53 = arith.mulf %43, %52 : vector<8x32xf32>
    %54 = vector.broadcast %5 : vector<1x32xf32> to vector<8x32xf32>
    %55 = arith.mulf %53, %54 : vector<8x32xf32>
    %56 = vector.broadcast %6 : vector<1x32xf32> to vector<8x32xf32>
    %57 = arith.addf %55, %56 : vector<8x32xf32>
    %c0_19 = arith.constant 0 : index
    %c0_20 = arith.constant 0 : index
    %58 = vector.load %arg1[%c0_19, %c0_20] : memref<8x32xf32, #tpu.memory_space<vmem>>, vector<8x32xf32>
    %59 = arith.addf %57, %58 : vector<8x32xf32>
    %cst_21 = arith.constant 0.000000e+00 : f32
    %60 = vector.broadcast %cst_21 : f32 to vector<8x32xf32>
    %61 = arith.maximumf %59, %60 : vector<8x32xf32>
    %c0_22 = arith.constant 0 : index
    %c0_23 = arith.constant 0 : index
    %62 = vector.load %arg5[%c0_22, %c0_23] : memref<8x32xf32, #tpu.memory_space<vmem>>, vector<8x32xf32>
    tpu.vector_store %arg5[%c0_22, %c0_23], %61 {strides = array<i32>} : memref<8x32xf32, #tpu.memory_space<vmem>>, vector<8x32xf32>,
    return
  }
  func.func @transform_0(%arg0: i32) -> (i32, i32) {
    %c0_i32 = arith.constant 0 : i32
    %c0_i32_0 = arith.constant 0 : i32
    return %arg0, %c0_i32 : i32, i32
  }
  func.func @transform_1(%arg0: i32) -> (i32, i32) {
    %c0_i32 = arith.constant 0 : i32
    %c0_i32_0 = arith.constant 0 : i32
    %c0_i32_1 = arith.constant 0 : i32
    return %c0_i32, %c0_i32_0 : i32, i32
  }
  func.func @transform_2(%arg0: i32) -> (i32, i32) {
    %c0_i32 = arith.constant 0 : i32
    %c0_i32_0 = arith.constant 0 : i32
    %c0_i32_1 = arith.constant 0 : i32
    return %c0_i32, %c0_i32_0 : i32, i32
  }
  func.func @transform_3(%arg0: i32) -> (i32, i32) {
    %c0_i32 = arith.constant 0 : i32
    %c0_i32_0 = arith.constant 0 : i32
    %c0_i32_1 = arith.constant 0 : i32
    return %c0_i32, %c0_i32_0 : i32, i32
  }
  func.func @transform_4(%arg0: i32) -> (i32, i32) {
    %c0_i32 = arith.constant 0 : i32
    %c0_i32_0 = arith.constant 0 : i32
    return %arg0, %c0_i32 : i32, i32
  }
}

</mosaic_0001>

<llo_original>
// kernel: tpu_custom_call.1
$region0: #{tpu_custom_call.1}
  #allocation0 [shape = 'u32[]', space=smem, size = 0x4, offset = 0x4, fixed_abs, tag = 'smem constant byte address 0x4 - core index']
  #allocation1 [shape = 'u32[144,128]{1,0:T(1,128)}', space=vmem, size = 0x12000, scoped, tag = 'internal scratch']
  %s0 = inlined_call_operand.hbm [shape: f32[8,32], index: 0, kind: input, shape index: {}]
  %s1 = inlined_call_operand.hbm [shape: f32[32,32], index: 1, kind: input, shape index: {}]
  %s2 = inlined_call_operand.hbm [shape: f32[32,32], index: 2, kind: input, shape index: {}]
  %s3 = inlined_call_operand.hbm [shape: f32[8,32], index: 3, kind: input, shape index: {}]
  %s4 = inlined_call_operand.hbm [shape: f32[8,32], index: 4, kind: output, shape index: {}]
  %s5 = sld [smem:[#allocation0]]
  $region42: #{tpu_custom_call.1} parent=0
    _
  %s7 = ssub.s32 1, %s5
  %s8 = scalar_select 0, %s7, %s5
  $region1: #{tpu_custom_call.1} parent=0
    #allocation2 [shape = 'u8[4096]{0}', space=vmem, size = 0x1000, scoped, tag = 'input window, operand 0, single buffered']
    #allocation3 [shape = 's32[1]{0}', space=sflag, size = 0x4, scoped, tag = 'scoped memory for tpu_custom_call.1']
    #allocation4 [shape = 's32[1]{0}', space=sflag, size = 0x4, scoped, tag = 'scoped memory for tpu_custom_call.1']
    #allocation5 [shape = 'u8[16384]{0}', space=vmem, size = 0x4000, scoped, tag = 'input window, operand 1, single buffered']
    #allocation6 [shape = 's32[1]{0}', space=sflag, size = 0x4, scoped, tag = 'scoped memory for tpu_custom_call.1']
    #allocation7 [shape = 'u8[16384]{0}', space=vmem, size = 0x4000, scoped, tag = 'input window, operand 2, single buffered']
    #allocation8 [shape = 'u8[4096]{0}', space=vmem, size = 0x1000, scoped, tag = 'input window, operand 3, single buffered']
    #allocation9 [shape = 's32[1]{0}', space=sflag, size = 0x4, scoped, tag = 'scoped memory for tpu_custom_call.1']
    #allocation10 [shape = 'u8[4096]{0}', space=vmem, size = 0x1000, scoped, tag = 'output window, operand 0, single buffered']
    %9 = vsyncpa [#allocation3], 0
    %10 = vsyncpa [#allocation6], 0
    %11 = vsyncpa [#allocation9], 0
    %12 = vsyncpa [#allocation4], 0
    // Predicated region
    $region2: #{tpu_custom_call.1} parent=1 // pred_check
      _
    $region3: #{tpu_custom_call.1} parent=1 // pred_check_branch
      %14 = sbr.rel (0) target = $region5
    $region4: #{tpu_custom_call.1} parent=1 // pred_region
      %s16 = ssub.s32 128, 128
      %17 = vsyncadd [#allocation3], %s16
      %s19 = sshll.u32 [#allocation2], 4
      %s20 = int_to_ptr.vmem [resolvable:$true] %s19
      %22 = dma.hbm_to_vmem [thread:$0]  %s0, 128, %s20, [#allocation3]
    $region5: #{tpu_custom_call.1} parent=1 // pred_fallthru
      _
    // Predicated region
    $region6: #{tpu_custom_call.1} parent=1 // pred_check
      _
    $region7: #{tpu_custom_call.1} parent=1 // pred_check_branch
      %24 = sbr.rel (0) target = $region9
    $region8: #{tpu_custom_call.1} parent=1 // pred_region
      %s26 = ssub.s32 512, 512
      %27 = vsyncadd [#allocation6], %s26
      %s28 = sshll.u32 [#allocation5], 4
      %s29 = int_to_ptr.vmem [resolvable:$true] %s28
      %34 = dma.hbm_to_vmem [thread:$0]  %s1, 512, %s29, [#allocation6], 128, 128, 8
    $region9: #{tpu_custom_call.1} parent=1 // pred_fallthru
      _
    // Predicated region
    $region10: #{tpu_custom_call.1} parent=1 // pred_check
      _
    $region11: #{tpu_custom_call.1} parent=1 // pred_check_branch
      %36 = sbr.rel (0) target = $region13
    $region12: #{tpu_custom_call.1} parent=1 // pred_region
      %s38 = ssub.s32 512, 512
      %39 = vsyncadd [#allocation6], %s38
      %s40 = sshll.u32 [#allocation7], 4
      %s41 = int_to_ptr.vmem [resolvable:$true] %s40
      %46 = dma.hbm_to_vmem [thread:$0]  %s2, 512, %s41, [#allocation6], 128, 128, 8
    $region13: #{tpu_custom_call.1} parent=1 // pred_fallthru
      _
    // Predicated region
    $region14: #{tpu_custom_call.1} parent=1 // pred_check
      _
    $region15: #{tpu_custom_call.1} parent=1 // pred_check_branch
      %48 = sbr.rel (0) target = $region17
    $region16: #{tpu_custom_call.1} parent=1 // pred_region
      %s50 = ssub.s32 128, 128
      %51 = vsyncadd [#allocation9], %s50
      %s53 = sshll.u32 [#allocation8], 4
      %s54 = int_to_ptr.vmem [resolvable:$true] %s53
      %56 = dma.hbm_to_vmem [thread:$0]  %s3, 128, %s54, [#allocation9]
    $region17: #{tpu_custom_call.1} parent=1 // pred_fallthru
      _
    // Predicated region
    $region18: #{tpu_custom_call.1} parent=1 // pred_check
      _
    $region19: #{tpu_custom_call.1} parent=1 // pred_check_branch
      %58 = sbr.rel (0) target = $region21
    $region20: #{tpu_custom_call.1} parent=1 // pred_region
      %59 = dma.done [#allocation3], 128
    $region21: #{tpu_custom_call.1} parent=1 // pred_fallthru
      _
    // Predicated region
    $region22: #{tpu_custom_call.1} parent=1 // pred_check
      _
    $region23: #{tpu_custom_call.1} parent=1 // pred_check_branch
      %61 = sbr.rel (0) target = $region25
    $region24: #{tpu_custom_call.1} parent=1 // pred_region
      %62 = dma.done [#allocation6], 512
    $region25: #{tpu_custom_call.1} parent=1 // pred_fallthru
      _
    // Predicated region
    $region26: #{tpu_custom_call.1} parent=1 // pred_check
      _
    $region27: #{tpu_custom_call.1} parent=1 // pred_check_branch
      %64 = sbr.rel (0) target = $region29
    $region28: #{tpu_custom_call.1} parent=1 // pred_region
      %65 = dma.done [#allocation6], 512
    $region29: #{tpu_custom_call.1} parent=1 // pred_fallthru
      _
    // Predicated region
    $region30: #{tpu_custom_call.1} parent=1 // pred_check
      _
    $region31: #{tpu_custom_call.1} parent=1 // pred_check_branch
      %67 = sbr.rel (0) target = $region33
    $region32: #{tpu_custom_call.1} parent=1 // pred_region
      %68 = dma.done [#allocation9], 128
    $region33: #{tpu_custom_call.1} parent=1 // pred_fallthru
      _
    %v69 = vld [vmem:[#allocation8] sm:$0xff]
    %v70 = vld [vmem:[#allocation2] sm:$0xff]
    %v71 = vld [vmem:[#allocation5] sm:$0xff]
    %v72 = vld [vmem:[#allocation5 + $0x8] sm:$0xff]
    %v73 = vld [vmem:[#allocation5 + $0x10] sm:$0xff]
    %v74 = vld [vmem:[#allocation5 + $0x18] sm:$0xff]
    %v75 = vlaneseq
    %v76 = vshrl.u32 %v75, 7
    %v77 = vsub.s32 0, %v76
    %v78 = vrot.slane %v69, %v77
    %vm79 = vcmask 261120
    %v81 = vsel %vm79, %v70, 0
    %83 = vmatprep.subr.mxu0 0.0
    %84 = vmatpush1.msra.mxu0 0.0
    %85 = vmatprep.subr.mxu0 0.0
    %86 = vmatpush1.msra.mxu0 0.0
    %87 = vmatprep.subr.mxu0 0.0
    %88 = vmatpush1.msra.mxu0 0.0
    %89 = vmatprep.subr.mxu0 0.0
    %90 = vmatpush1.msra.mxu0 0.0
    %91 = vmatprep.subr.mxu0 0.0
    %92 = vmatpush1.msra.mxu0 0.0
    %93 = vmatprep.subr.mxu0 0.0
    %94 = vmatpush1.msra.mxu0 0.0
    %95 = vmatprep.subr.mxu0 0.0
    %96 = vmatpush1.msra.mxu0 0.0
    %97 = vmatprep.subr.mxu0 0.0
    %98 = vmatpush1.msra.mxu0 0.0
    %99 = vmatprep.subr.mxu0 0.0
    %100 = vmatpush1.msra.mxu0 0.0
    %101 = vmatprep.subr.mxu0 0.0
    %102 = vmatpush1.msra.mxu0 0.0
    %103 = vmatprep.subr.mxu0 0.0
    %104 = vmatpush1.msra.mxu0 0.0
    %105 = vmatprep.subr.mxu0 0.0
    %106 = vmatpush1.msra.mxu0 0.0
    %107 = vmatprep.subr.mxu0 0.0
    %108 = vmatpush1.msra.mxu0 %v74
    %109 = vmatprep.subr.mxu0 0.0
    %110 = vmatpush1.msra.mxu0 %v73
    %111 = vmatprep.subr.mxu0 0.0
    %112 = vmatpush1.msra.mxu0 %v72
    %113 = vmatprep.subr.mxu0 0.0
    %114 = vmatpush1.msra.mxu0 %v71
    %115 = vmatprep.subr.mxu0 0.0
    %116 = vmatpush2.msra.mxu0 0.0
    %117 = vmatprep.subr.mxu0 0.0
    %118 = vmatpush2.msra.mxu0 0.0
    %119 = vmatprep.subr.mxu0 0.0
    %120 = vmatpush2.msra.mxu0 0.0
    %121 = vmatprep.subr.mxu0 0.0
    %122 = vmatpush2.msra.mxu0 0.0
    %123 = vmatprep.subr.mxu0 0.0
    %124 = vmatpush2.msra.mxu0 0.0
    %125 = vmatprep.subr.mxu0 0.0
    %126 = vmatpush2.msra.mxu0 0.0
    %127 = vmatprep.subr.mxu0 0.0
    %128 = vmatpush2.msra.mxu0 0.0
    %129 = vmatprep.subr.mxu0 0.0
    %130 = vmatpush2.msra.mxu0 0.0
    %131 = vmatprep.subr.mxu0 0.0
    %132 = vmatpush2.msra.mxu0 0.0
    %133 = vmatprep.subr.mxu0 0.0
    %134 = vmatpush2.msra.mxu0 0.0
    %135 = vmatprep.subr.mxu0 0.0
    %136 = vmatpush2.msra.mxu0 0.0
    %137 = vmatprep.subr.mxu0 0.0
    %138 = vmatpush2.msra.mxu0 0.0
    %139 = vmatprep.subr.mxu0 0.0
    %140 = vmatpush2.msra.mxu0 0.0
    %141 = vmatprep.subr.mxu0 0.0
    %142 = vmatpush2.msra.mxu0 0.0
    %143 = vmatprep.subr.mxu0 0.0
    %144 = vmatpush2.msra.mxu0 0.0
    %145 = vmatprep.subr.mxu0 0.0
    %146 = vmatpush2.msra.mxu0 0.0
    %147 = vmatprep.mubr.f32.mxu0 0.0
    %148 = vmatmul.mubr.f32.gmra.mxu0 %v81
    %v149 = vpop.f32.mrf.mxu0
    %v150 = vadd.f32 %v78, %v149
    %v151 = vpop.f32.mrf.mxu0
    %152 = vdwg.mxu0
    %v153 = vsel %vm79, %v150, 0.0
    %154 = vadd.xlane.f32.xlu0 %v153
    %v155 = vpop.xlane.xlu0 %154
    %v156 = vrcp.pop 32.0
    %v157 = vmul.f32 %v155, %v156
    %v158 = vsub.f32 %v150, %v157
    %v159 = vmul.f32 %v158, %v158
    %v160 = vsel %vm79, %v159, 0.0
    %161 = vadd.xlane.f32.xlu0 %v160
    %v162 = vpop.xlane.xlu0 %161
    %v163 = vmul.f32 %v162, %v156
    %v164 = vadd.f32 %v163, 1e-05
    %v165 = vrsqrt.pop %v164
    %v166 = vmul.f32 %v158, %v165
    %v167 = vlaneseq
    %v168 = vshrl.u32 %v167, 7
    %v169 = vsub.s32 1, %v168
    %v170 = vrot.slane %v69, %v169
    %v171 = vmul.f32 %v166, %v170
    %v172 = vlaneseq
    %v173 = vshrl.u32 %v172, 7
    %v174 = vsub.s32 2, %v173
    %v175 = vrot.slane %v69, %v174
    %v176 = vadd.f32 %v171, %v175
    %v177 = vmax.f32 %v176, 0.0
    %v178 = vld [vmem:[#allocation7] sm:$0xff]
    %v179 = vld [vmem:[#allocation7 + $0x8] sm:$0xff]
    %v180 = vld [vmem:[#allocation7 + $0x10] sm:$0xff]
    %v181 = vld [vmem:[#allocation7 + $0x18] sm:$0xff]
    %v182 = vlaneseq
    %v183 = vshrl.u32 %v182, 7
    %v184 = vsub.s32 3, %v183
    %v185 = vrot.slane %v69, %v184
    %v187 = vsel %vm79, %v177, 0
    %189 = vmatprep.subr.mxu0 0.0
    %190 = vmatpush1.msra.mxu0 0.0
    %191 = vmatprep.subr.mxu0 0.0
    %192 = vmatpush1.msra.mxu0 0.0
    %193 = vmatprep.subr.mxu0 0.0
    %194 = vmatpush1.msra.mxu0 0.0
    %195 = vmatprep.subr.mxu0 0.0
    %196 = vmatpush1.msra.mxu0 0.0
    %197 = vmatprep.subr.mxu0 0.0
    %198 = vmatpush1.msra.mxu0 0.0
    %199 = vmatprep.subr.mxu0 0.0
    %200 = vmatpush1.msra.mxu0 0.0
    %201 = vmatprep.subr.mxu0 0.0
    %202 = vmatpush1.msra.mxu0 0.0
    %203 = vmatprep.subr.mxu0 0.0
    %204 = vmatpush1.msra.mxu0 0.0
    %205 = vmatprep.subr.mxu0 0.0
    %206 = vmatpush1.msra.mxu0 0.0
    %207 = vmatprep.subr.mxu0 0.0
    %208 = vmatpush1.msra.mxu0 0.0
    %209 = vmatprep.subr.mxu0 0.0
    %210 = vmatpush1.msra.mxu0 0.0
    %211 = vmatprep.subr.mxu0 0.0
    %212 = vmatpush1.msra.mxu0 0.0
    %213 = vmatprep.subr.mxu0 0.0
    %214 = vmatpush1.msra.mxu0 %v181
    %215 = vmatprep.subr.mxu0 0.0
    %216 = vmatpush1.msra.mxu0 %v180
    %217 = vmatprep.subr.mxu0 0.0
    %218 = vmatpush1.msra.mxu0 %v179
    %219 = vmatprep.subr.mxu0 0.0
    %220 = vmatpush1.msra.mxu0 %v178
    %221 = vmatprep.subr.mxu0 0.0
    %222 = vmatpush2.msra.mxu0 0.0
    %223 = vmatprep.subr.mxu0 0.0
    %224 = vmatpush2.msra.mxu0 0.0
    %225 = vmatprep.subr.mxu0 0.0
    %226 = vmatpush2.msra.mxu0 0.0
    %227 = vmatprep.subr.mxu0 0.0
    %228 = vmatpush2.msra.mxu0 0.0
    %229 = vmatprep.subr.mxu0 0.0
    %230 = vmatpush2.msra.mxu0 0.0
    %231 = vmatprep.subr.mxu0 0.0
    %232 = vmatpush2.msra.mxu0 0.0
    %233 = vmatprep.subr.mxu0 0.0
    %234 = vmatpush2.msra.mxu0 0.0
    %235 = vmatprep.subr.mxu0 0.0
    %236 = vmatpush2.msra.mxu0 0.0
    %237 = vmatprep.subr.mxu0 0.0
    %238 = vmatpush2.msra.mxu0 0.0
    %239 = vmatprep.subr.mxu0 0.0
    %240 = vmatpush2.msra.mxu0 0.0
    %241 = vmatprep.subr.mxu0 0.0
    %242 = vmatpush2.msra.mxu0 0.0
    %243 = vmatprep.subr.mxu0 0.0
    %244 = vmatpush2.msra.mxu0 0.0
    %245 = vmatprep.subr.mxu0 0.0
    %246 = vmatpush2.msra.mxu0 0.0
    %247 = vmatprep.subr.mxu0 0.0
    %248 = vmatpush2.msra.mxu0 0.0
    %249 = vmatprep.subr.mxu0 0.0
    %250 = vmatpush2.msra.mxu0 0.0
    %251 = vmatprep.subr.mxu0 0.0
    %252 = vmatpush2.msra.mxu0 0.0
    %253 = vmatprep.mubr.f32.mxu0 0.0
    %254 = vmatmul.mubr.f32.gmra.mxu0 %v187
    %v255 = vpop.f32.mrf.mxu0
    %v256 = vadd.f32 %v185, %v255
    %v257 = vpop.f32.mrf.mxu0
    %258 = vdwg.mxu0
    %v259 = vsel %vm79, %v256, 0.0
    %260 = vadd.xlane.f32.xlu0 %v259
    %v261 = vpop.xlane.xlu0 %260
    %v262 = vmul.f32 %v261, %v156
    %v263 = vsub.f32 %v256, %v262
    %v264 = vmul.f32 %v263, %v263
    %v265 = vsel %vm79, %v264, 0.0
    %266 = vadd.xlane.f32.xlu0 %v265
    %v267 = vpop.xlane.xlu0 %266
    %v268 = vmul.f32 %v267, %v156
    %v269 = vadd.f32 %v268, 1e-05
    %v270 = vrsqrt.pop %v269
    %v271 = vmul.f32 %v263, %v270
    %v272 = vlaneseq
    %v273 = vshrl.u32 %v272, 7
    %v274 = vsub.s32 4, %v273
    %v275 = vrot.slane %v69, %v274
    %v276 = vmul.f32 %v271, %v275
    %v277 = vlaneseq
    %v278 = vshrl.u32 %v277, 7
    %v279 = vsub.s32 5, %v278
    %v280 = vrot.slane %v69, %v279
    %v281 = vadd.f32 %v276, %v280
    %v282 = vadd.f32 %v281, %v70
    %v283 = vmax.f32 %v282, 0.0
    %284 = vst.msk [vmem:[#allocation10] sm:$0xff] %vm79, %v283
    // Predicated region
    $region34: #{tpu_custom_call.1} parent=1 // pred_check
      _
    $region35: #{tpu_custom_call.1} parent=1 // pred_check_branch
      %286 = sbr.rel (0) target = $region37
    $region36: #{tpu_custom_call.1} parent=1 // pred_region
      %s288 = ssub.s32 128, 128
      %289 = vsyncadd [#allocation4], %s288
      %s291 = sshll.u32 [#allocation10], 4
      %s292 = int_to_ptr.vmem [resolvable:$true] %s291
      %294 = dma.vmem_to_hbm [thread:$0]  %s292, 128, %s4, [#allocation4]
    $region37: #{tpu_custom_call.1} parent=1 // pred_fallthru
      _
    // Predicated region
    $region38: #{tpu_custom_call.1} parent=1 // pred_check
      _
    $region39: #{tpu_custom_call.1} parent=1 // pred_check_branch
      %296 = sbr.rel (0) target = $region41
    $region40: #{tpu_custom_call.1} parent=1 // pred_region
      %297 = dma.done [#allocation4], 128
    $region41: #{tpu_custom_call.1} parent=1 // pred_fallthru
      _
    %298 = vsyncpa [#allocation3], 1
    %299 = vsyncpa [#allocation6], 1
    %300 = vsyncpa [#allocation9], 1
    %301 = vsyncpa [#allocation4], 1

</llo_original>
